<compile_context>
chip_gen: v7x
topology: tpu7x:2x2x1
jax: 0.10.0
libtpu: 0.0.40
codegen_flags: <defaults>
</compile_context>

<pallas_src>
import functools

import jax
import jax.numpy as jnp
from jax.experimental import pallas as pl
from jax.experimental.pallas import tpu as pltpu

H1, H2, H3 = 128, 256, 512  # hidden sizes fixed by the PyTorch module


def _round_up(n, m):
    return ((n + m - 1) // m) * m


def mlp_kernel(x_ref, w1_ref, b1_ref, w2_ref, b2_ref, w3_ref, b3_ref, o_ref):
    # x arrives f32 straight from HBM (no separate pad/cast pass); the bf16
    # cast runs on the VPU here. Matmuls accumulate f32 on the MXU; bias+ReLU
    # run in f32 on the VPU; the final store uses o_ref's dtype (bf16 default).
    x = x_ref[...].astype(jnp.bfloat16)
    h1 = jnp.dot(x, w1_ref[...], preferred_element_type=jnp.float32)
    h1 = jnp.maximum(h1 + b1_ref[...], 0.0)
    h2 = jnp.dot(h1.astype(jnp.bfloat16), w2_ref[...],
                 preferred_element_type=jnp.float32)
    h2 = jnp.maximum(h2 + b2_ref[...], 0.0)
    out = jnp.dot(h2.astype(jnp.bfloat16), w3_ref[...],
                  preferred_element_type=jnp.float32)
    o_ref[...] = (out + b3_ref[...]).astype(o_ref.dtype)


def _choose_tb(batch, d_in, out_bytes):
    """Batch tile: multiple of 8, <=512 rows (fills the MXU M dim), >=4 grid
    steps for mid/large batches, minimal batch-padding waste, and VMEM-guarded
    so the same kernel stays valid on v5e/v6e/v7x."""
    b8 = _round_up(batch, 8)
    if b8 <= 256:
        tb = b8                                   # tiny batch: single tile
    else:
        best_tb, best_key = None, None
        for cand in (512, 384, 256, 128):
            steps = pl.cdiv(b8, cand)
            pad = steps * cand - b8
            # prefer >=4 steps, then least padded rows, then the bigger tile
            key = (steps < 4, pad, -cand)
            if best_key is None or key < best_key:
                best_key, best_tb = key, cand
        tb = best_tb

    # VMEM guard: double-buffered f32 x block + double-buffered output block
    # + resident weights/biases + f32 intermediates must stay well under the
    # 32 MiB scoped limit set below (v7x: 64 MiB physical; v5e/v6e: 128 MiB).
    weight_bytes = 2 * (d_in * H1 + H1 * H2 + H2 * H3) + 4 * (H1 + H2 + H3)
    budget = 24 * 1024 * 1024
    while tb > 8:
        per_step = (2 * tb * d_in * 4              # x blocks (f32, 2 buffers)
                    + 2 * tb * H3 * out_bytes      # out blocks (2 buffers)
                    + tb * (H1 + H2 + H3) * 4      # f32 intermediates
                    + weight_bytes)
        if per_step <= budget:
            break
        tb = max(8, _round_up(tb // 2, 8))
    return tb


def prepare_params(params):
    """One-time prep: weights -> bf16 (native MXU operand format); biases stay
    f32 shaped (1, H) for lane-broadcast adds. No K padding (see review)."""
    return {
        "w1": params["w1"].astype(jnp.bfloat16),
        "w2": params["w2"].astype(jnp.bfloat16),
        "w3": params["w3"].astype(jnp.bfloat16),
        "b1": params["b1"].astype(jnp.float32).reshape(1, H1),
        "b2": params["b2"].astype(jnp.float32).reshape(1, H2),
        "b3": params["b3"].astype(jnp.float32).reshape(1, H3),
    }


@functools.partial(jax.jit, static_argnames=("tb", "out_dtype"))
def simple_nn_forward(x, prepped, *, tb=None, out_dtype=jnp.bfloat16):
    """Fused MLP forward. x: (B, input_size) f32. prepped: prepare_params(...).

    out_dtype=jnp.bfloat16 is the fast path (halves the store-bound output
    writeback); pass jnp.float32 for closer parity with the f32 reference.
    """
    B, d_in = x.shape
    out_bytes = jnp.dtype(out_dtype).itemsize

    if tb is None:
        tb = _choose_tb(B, d_in, out_bytes)
    b_pad = _round_up(B, tb)

    # Only the ragged batch tail is padded (rows, f32); x keeps its dtype and
    # its K extent, so there is no extra pre-kernel HBM read+write pass.
    x_p = x if b_pad == B else jnp.pad(x, ((0, b_pad - B), (0, 0)))

    grid = (b_pad // tb,)

    def invariant(shape):
        # Whole array as one block with a grid-invariant index_map: Pallas
        # DMAs it once and keeps it resident in VMEM across the batch axis.
        return pl.BlockSpec(shape, lambda i: tuple(0 for _ in shape))

    w1, w2, w3 = prepped["w1"], prepped["w2"], prepped["w3"]
    b1, b2, b3 = prepped["b1"], prepped["b2"], prepped["b3"]

    flops = 2 * b_pad * (d_in * H1 + H1 * H2 + H2 * H3)
    bytes_accessed = (
        x_p.size * 4                               # f32 activations in
        + (w1.size + w2.size + w3.size) * 2        # bf16 weights
        + (b1.size + b2.size + b3.size) * 4        # f32 biases
        + b_pad * H3 * out_bytes                   # output (bf16 by default)
    )
    cost = pl.CostEstimate(flops=flops, transcendentals=0,
                           bytes_accessed=bytes_accessed)

    out = pl.pallas_call(
        mlp_kernel,
        out_shape=jax.ShapeDtypeStruct((b_pad, H3), out_dtype),
        grid_spec=pltpu.PrefetchScalarGridSpec(
            num_scalar_prefetch=0,
            grid=grid,
            in_specs=[
                # (tb, d_in): last dim equals the full array dim, so the
                # (8,128) rule is satisfied without padding K.
                pl.BlockSpec((tb, d_in), lambda i: (i, 0)),
                invariant(w1.shape), invariant(b1.shape),
                invariant(w2.shape), invariant(b2.shape),
                invariant(w3.shape), invariant(b3.shape),
            ],
            # Output is full 512 lanes wide -> unmasked vector stores.
            out_specs=pl.BlockSpec((tb, H3), lambda i: (i, 0)),
        ),
        compiler_params=pltpu.CompilerParams(
            # Batch axis is parallel: no-op on v5e/v6e (1 TC), shards the
            # grid across both v7x TensorCores.
            dimension_semantics=("parallel",),
            # 32 MiB is a safe explicit cap on every generation; _choose_tb
            # keeps per-step usage under ~24 MiB.
            vmem_limit_bytes=32 * 1024 * 1024,
        ),
        cost_estimate=cost,
    )(x_p, w1, b1, w2, b2, w3, b3)

    return out[:B] if b_pad != B else out


def init_params(key, input_size):
    """PyTorch-style uniform(-1/sqrt(fan_in), 1/sqrt(fan_in)) init, deterministic.
    Weights stored pre-transposed as (in_features, out_features)."""
    dims = [(input_size, H1), (H1, H2), (H2, H3)]
    params = {}
    keys = jax.random.split(key, 2 * len(dims))
    for idx, (fan_in, fan_out) in enumerate(dims):
        bound = 1.0 / (fan_in ** 0.5)
        w = jax.random.uniform(keys[2 * idx], (fan_in, fan_out),
                               minval=-bound, maxval=bound, dtype=jnp.float32)
        b = jax.random.uniform(keys[2 * idx + 1], (1, fan_out),
                               minval=-bound, maxval=bound, dtype=jnp.float32)
        params[f"w{idx + 1}"] = w
        params[f"b{idx + 1}"] = b
    return params


def reference_forward(x, params):
    h = jnp.maximum(x @ params["w1"] + params["b1"], 0.0)
    h = jnp.maximum(h @ params["w2"] + params["b2"], 0.0)
    return h @ params["w3"] + params["b3"]


if __name__ == "__main__":
    key = jax.random.PRNGKey(0)
    k_x, k_p = jax.random.split(key)

    batch = 8
    input_size = 64
    x = jax.random.normal(k_x, (batch, input_size), dtype=jnp.float32)
    params = init_params(k_p, input_size)
    prepped = prepare_params(params)

    ref = reference_forward(x, params)

    # Fast path: bf16 output (f32 accumulation inside the kernel).
    out = jax.block_until_ready(simple_nn_forward(x, prepped))
    assert out.shape == (batch, H3), out.shape
    assert out.dtype == jnp.bfloat16, out.dtype
    out_f = out.astype(jnp.float32)
    max_err = float(jnp.max(jnp.abs(out_f - ref)))
    # bf16 matmul operands + bf16 output -> loosened tolerance vs f32 ref.
    assert jnp.allclose(out_f, ref, atol=5e-2, rtol=5e-2), f"max abs err {max_err}"

    # f32-output path for callers needing closer parity with the PyTorch f32
    # forward (same kernel, only the final store dtype changes).
    out_f32 = jax.block_until_ready(
        simple_nn_forward(x, prepped, out_dtype=jnp.float32))
    assert out_f32.dtype == jnp.float32
    assert jnp.allclose(out_f32, ref, atol=5e-2, rtol=5e-2)

    print("KERNEL_OK")
</pallas_src>

<mosaic_0001>
module attributes {stable_mosaic.version = 11 : i64} {
  func.func @mlp_kernel(%arg0: i32, %arg1: memref<8x64xf32, #tpu.memory_space<vmem>>, %arg2: memref<64x128xbf16, #tpu.memory_space<vmem>>, %arg3: memref<1x128xf32, #tpu.memory_space<vmem>>, %arg4: memref<128x256xbf16, #tpu.memory_space<vmem>>, %arg5: memref<1x256xf32, #tpu.memory_space<vmem>>, %arg6: memref<256x512xbf16, #tpu.memory_space<vmem>>, %arg7: memref<1x512xf32, #tpu.memory_space<vmem>>, %arg8: memref<8x512xbf16, #tpu.memory_space<vmem>>) attributes {dimension_semantics = [#tpu.dimension_semantics<parallel>], iteration_bounds = array<i64: 1>, scalar_prefetch = 0 : i64, scratch_operands = 0 : i64, tpu.core_type = #tpu.core_type<tc>, window_params = [{transform_indices = @transform_0, window_bounds = array<i64: 8, 64>}, {pipeline_mode = #tpu.pipeline_mode<synchronous>, transform_indices = @transform_1, window_bounds = array<i64: 64, 128>}, {pipeline_mode = #tpu.pipeline_mode<synchronous>, transform_indices = @transform_2, window_bounds = array<i64: 1, 128>}, {pipeline_mode = #tpu.pipeline_mode<synchronous>, transform_indices = @transform_3, window_bounds = array<i64: 128, 256>}, {pipeline_mode = #tpu.pipeline_mode<synchronous>, transform_indices = @transform_4, window_bounds = array<i64: 1, 256>}, {pipeline_mode = #tpu.pipeline_mode<synchronous>, transform_indices = @transform_5, window_bounds = array<i64: 256, 512>}, {pipeline_mode = #tpu.pipeline_mode<synchronous>, transform_indices = @transform_6, window_bounds = array<i64: 1, 512>}, {transform_indices = @transform_7, window_bounds = array<i64: 8, 512>}]} {
    %c0 = arith.constant 0 : index
    %c0_0 = arith.constant 0 : index
    %0 = vector.load %arg1[%c0, %c0_0] : memref<8x64xf32, #tpu.memory_space<vmem>>, vector<8x64xf32>
    %1 = arith.truncf %0 : vector<8x64xf32> to vector<8x64xbf16>
    %c0_1 = arith.constant 0 : index
    %c0_2 = arith.constant 0 : index
    %2 = vector.load %arg2[%c0_1, %c0_2] : memref<64x128xbf16, #tpu.memory_space<vmem>>, vector<64x128xbf16>
    %cst = arith.constant dense<0.000000e+00> : vector<8x128xf32>
    %3 = tpu.matmul %1, %2, %cst {dimension_numbers = #tpu.dot_dimension_numbers<[1], [0], [0], [1], [0, 0, 1, 1], [], []>} : vector<8x64xbf16>, vector<64x128xbf16>, vector<8x128xf32> -> vector<8x128xf32>
    %c0_3 = arith.constant 0 : index
    %c0_4 = arith.constant 0 : index
    %4 = vector.load %arg3[%c0_3, %c0_4] : memref<1x128xf32, #tpu.memory_space<vmem>>, vector<1x128xf32>
    %5 = vector.broadcast %4 : vector<1x128xf32> to vector<8x128xf32>
    %6 = arith.addf %3, %5 : vector<8x128xf32>
    %cst_5 = arith.constant 0.000000e+00 : f32
    %7 = vector.broadcast %cst_5 : f32 to vector<8x128xf32>
    %8 = arith.maximumf %6, %7 : vector<8x128xf32>
    %9 = arith.truncf %8 : vector<8x128xf32> to vector<8x128xbf16>
    %c0_6 = arith.constant 0 : index
    %c0_7 = arith.constant 0 : index
    %10 = vector.load %arg4[%c0_6, %c0_7] : memref<128x256xbf16, #tpu.memory_space<vmem>>, vector<128x256xbf16>
    %cst_8 = arith.constant dense<0.000000e+00> : vector<8x256xf32>
    %11 = tpu.matmul %9, %10, %cst_8 {dimension_numbers = #tpu.dot_dimension_numbers<[1], [0], [0], [1], [0, 0, 1, 1], [], []>} : vector<8x128xbf16>, vector<128x256xbf16>, vector<8x256xf32> -> vector<8x256xf32>
    %c0_9 = arith.constant 0 : index
    %c0_10 = arith.constant 0 : index
    %12 = vector.load %arg5[%c0_9, %c0_10] : memref<1x256xf32, #tpu.memory_space<vmem>>, vector<1x256xf32>
    %13 = vector.broadcast %12 : vector<1x256xf32> to vector<8x256xf32>
    %14 = arith.addf %11, %13 : vector<8x256xf32>
    %cst_11 = arith.constant 0.000000e+00 : f32
    %15 = vector.broadcast %cst_11 : f32 to vector<8x256xf32>
    %16 = arith.maximumf %14, %15 : vector<8x256xf32>
    %17 = arith.truncf %16 : vector<8x256xf32> to vector<8x256xbf16>
    %c0_12 = arith.constant 0 : index
    %c0_13 = arith.constant 0 : index
    %18 = vector.load %arg6[%c0_12, %c0_13] : memref<256x512xbf16, #tpu.memory_space<vmem>>, vector<256x512xbf16>
    %cst_14 = arith.constant dense<0.000000e+00> : vector<8x512xf32>
    %19 = tpu.matmul %17, %18, %cst_14 {dimension_numbers = #tpu.dot_dimension_numbers<[1], [0], [0], [1], [0, 0, 1, 1], [], []>} : vector<8x256xbf16>, vector<256x512xbf16>, vector<8x512xf32> -> vector<8x512xf32>
    %c0_15 = arith.constant 0 : index
    %c0_16 = arith.constant 0 : index
    %20 = vector.load %arg7[%c0_15, %c0_16] : memref<1x512xf32, #tpu.memory_space<vmem>>, vector<1x512xf32>
    %21 = vector.broadcast %20 : vector<1x512xf32> to vector<8x512xf32>
    %22 = arith.addf %19, %21 : vector<8x512xf32>
    %23 = arith.truncf %22 : vector<8x512xf32> to vector<8x512xbf16>
    %c0_17 = arith.constant 0 : index
    %c0_18 = arith.constant 0 : index
    %24 = vector.load %arg8[%c0_17, %c0_18] : memref<8x512xbf16, #tpu.memory_space<vmem>>, vector<8x512xbf16>
    tpu.vector_store %arg8[%c0_17, %c0_18], %23 {strides = array<i32>} : memref<8x512xbf16, #tpu.memory_space<vmem>>, vector<8x512xbf16>,
    return
  }
  func.func @transform_0(%arg0: i32) -> (i32, i32) {
    %c0_i32 = arith.constant 0 : i32
    %c0_i32_0 = arith.constant 0 : i32
    return %arg0, %c0_i32 : i32, i32
  }
  func.func @transform_1(%arg0: i32) -> (i32, i32) {
    %c0_i32 = arith.constant 0 : i32
    %c0_i32_0 = arith.constant 0 : i32
    %c0_i32_1 = arith.constant 0 : i32
    return %c0_i32, %c0_i32_0 : i32, i32
  }
  func.func @transform_2(%arg0: i32) -> (i32, i32) {
    %c0_i32 = arith.constant 0 : i32
    %c0_i32_0 = arith.constant 0 : i32
    %c0_i32_1 = arith.constant 0 : i32
    return %c0_i32, %c0_i32_0 : i32, i32
  }
  func.func @transform_3(%arg0: i32) -> (i32, i32) {
    %c0_i32 = arith.constant 0 : i32
    %c0_i32_0 = arith.constant 0 : i32
    %c0_i32_1 = arith.constant 0 : i32
    return %c0_i32, %c0_i32_0 : i32, i32
  }
  func.func @transform_4(%arg0: i32) -> (i32, i32) {
    %c0_i32 = arith.constant 0 : i32
    %c0_i32_0 = arith.constant 0 : i32
    %c0_i32_1 = arith.constant 0 : i32
    return %c0_i32, %c0_i32_0 : i32, i32
  }
  func.func @transform_5(%arg0: i32) -> (i32, i32) {
    %c0_i32 = arith.constant 0 : i32
    %c0_i32_0 = arith.constant 0 : i32
    %c0_i32_1 = arith.constant 0 : i32
    return %c0_i32, %c0_i32_0 : i32, i32
  }
  func.func @transform_6(%arg0: i32) -> (i32, i32) {
    %c0_i32 = arith.constant 0 : i32
    %c0_i32_0 = arith.constant 0 : i32
    %c0_i32_1 = arith.constant 0 : i32
    return %c0_i32, %c0_i32_0 : i32, i32
  }
  func.func @transform_7(%arg0: i32) -> (i32, i32) {
    %c0_i32 = arith.constant 0 : i32
    %c0_i32_0 = arith.constant 0 : i32
    return %arg0, %c0_i32 : i32, i32
  }
}

</mosaic_0001>

<llo_original>
// kernel: simple_nn_forward.1
$region0: #{simple_nn_forward.1}
  #allocation0 [shape = 'u32[]', space=smem, size = 0x4, offset = 0x4, fixed_abs, tag = 'smem constant byte address 0x4 - core index']
  #allocation1 [shape = 'u32[144,128]{1,0:T(1,128)}', space=vmem, size = 0x12000, scoped, tag = 'internal scratch']
  %s0 = inlined_call_operand.hbm [shape: f32[8,64], index: 0, kind: input, shape index: {}]
  %s1 = inlined_call_operand.hbm [shape: bf16[64,128], index: 1, kind: input, shape index: {}]
  %s2 = inlined_call_operand.vmem [shape: f32[1,128], index: 2, kind: input, shape index: {}]
  %s3 = inlined_call_operand.hbm [shape: bf16[128,256], index: 3, kind: input, shape index: {}]
  %s4 = inlined_call_operand.vmem [shape: f32[1,256], index: 4, kind: input, shape index: {}]
  %s5 = inlined_call_operand.hbm [shape: bf16[256,512], index: 5, kind: input, shape index: {}]
  %s6 = inlined_call_operand.vmem [shape: f32[1,512], index: 6, kind: input, shape index: {}]
  %s7 = inlined_call_operand.hbm [shape: bf16[8,512], index: 7, kind: output, shape index: {}]
  %s8 = sld [smem:[#allocation0]]
  $region54: #{simple_nn_forward.1} parent=0
    _
  %s10 = ssub.s32 1, %s8
  %s11 = scalar_select 0, %s10, %s8
  $region1: #{simple_nn_forward.1} parent=0
    #allocation2 [shape = 'u8[4096]{0}', space=vmem, size = 0x1000, scoped, tag = 'input window, operand 0, single buffered']
    #allocation3 [shape = 's32[1]{0}', space=sflag, size = 0x4, scoped, tag = 'scoped memory for simple_nn_forward.1']
    #allocation4 [shape = 's32[1]{0}', space=sflag, size = 0x4, scoped, tag = 'scoped memory for simple_nn_forward.1']
    #allocation5 [shape = 'u8[16384]{0}', space=vmem, size = 0x4000, scoped, tag = 'input window, operand 1, single buffered']
    #allocation6 [shape = 's32[1]{0}', space=sflag, size = 0x4, scoped, tag = 'scoped memory for simple_nn_forward.1']
    #allocation7 [shape = 'u8[65536]{0}', space=vmem, size = 0x10000, scoped, tag = 'input window, operand 3, single buffered']
    #allocation8 [shape = 'u8[262144]{0}', space=vmem, size = 0x40000, scoped, tag = 'input window, operand 5, single buffered']
    #allocation9 [shape = 's32[1]{0}', space=sflag, size = 0x4, scoped, tag = 'scoped memory for simple_nn_forward.1']
    #allocation10 [shape = 'u8[8192]{0}', space=vmem, size = 0x2000, scoped, tag = 'output window, operand 0, single buffered']
    %12 = vsyncpa [#allocation3], 0
    %13 = vsyncpa [#allocation6], 0
    %14 = vsyncpa [#allocation9], 0
    %15 = vsyncpa [#allocation4], 0
    // Predicated region
    $region2: #{simple_nn_forward.1} parent=1 // pred_check
      _
    $region3: #{simple_nn_forward.1} parent=1 // pred_check_branch
      %17 = sbr.rel (0) target = $region5
    $region4: #{simple_nn_forward.1} parent=1 // pred_region
      %s19 = ssub.s32 128, 128
      %20 = vsyncadd [#allocation3], %s19
      %s22 = sshll.u32 [#allocation2], 4
      %s23 = int_to_ptr.vmem [resolvable:$true] %s22
      %25 = dma.hbm_to_vmem [thread:$0]  %s0, 128, %s23, [#allocation3]
    $region5: #{simple_nn_forward.1} parent=1 // pred_fallthru
      _
    // Predicated region
    $region6: #{simple_nn_forward.1} parent=1 // pred_check
      _
    $region7: #{simple_nn_forward.1} parent=1 // pred_check_branch
      %27 = sbr.rel (0) target = $region9
    $region8: #{simple_nn_forward.1} parent=1 // pred_region
      %s29 = ssub.s32 512, 512
      %30 = vsyncadd [#allocation6], %s29
      %s31 = sshll.u32 [#allocation5], 4
      %s32 = int_to_ptr.vmem [resolvable:$true] %s31
      %37 = dma.hbm_to_vmem [thread:$0]  %s1, 512, %s32, [#allocation6], 64, 64, 4
    $region9: #{simple_nn_forward.1} parent=1 // pred_fallthru
      _
    // Predicated region
    $region10: #{simple_nn_forward.1} parent=1 // pred_check
      _
    $region11: #{simple_nn_forward.1} parent=1 // pred_check_branch
      %39 = sbr.rel (0) target = $region13
    $region12: #{simple_nn_forward.1} parent=1 // pred_region
      _
    $region13: #{simple_nn_forward.1} parent=1 // pred_fallthru
      _
    // Predicated region
    $region14: #{simple_nn_forward.1} parent=1 // pred_check
      _
    $region15: #{simple_nn_forward.1} parent=1 // pred_check_branch
      %41 = sbr.rel (0) target = $region17
    $region16: #{simple_nn_forward.1} parent=1 // pred_region
      %s43 = ssub.s32 2048, 2048
      %44 = vsyncadd [#allocation6], %s43
      %s45 = sshll.u32 [#allocation7], 4
      %s46 = int_to_ptr.vmem [resolvable:$true] %s45
      %51 = dma.hbm_to_vmem [thread:$0]  %s3, 2048, %s46, [#allocation6], 128, 128, 8
    $region17: #{simple_nn_forward.1} parent=1 // pred_fallthru
      _
    // Predicated region
    $region18: #{simple_nn_forward.1} parent=1 // pred_check
      _
    $region19: #{simple_nn_forward.1} parent=1 // pred_check_branch
      %53 = sbr.rel (0) target = $region21
    $region20: #{simple_nn_forward.1} parent=1 // pred_region
      _
    $region21: #{simple_nn_forward.1} parent=1 // pred_fallthru
      _
    // Predicated region
    $region22: #{simple_nn_forward.1} parent=1 // pred_check
      _
    $region23: #{simple_nn_forward.1} parent=1 // pred_check_branch
      %55 = sbr.rel (0) target = $region25
    $region24: #{simple_nn_forward.1} parent=1 // pred_region
      %s57 = ssub.s32 8192, 8192
      %58 = vsyncadd [#allocation9], %s57
      %s59 = sshll.u32 [#allocation8], 4
      %s60 = int_to_ptr.vmem [resolvable:$true] %s59
      %65 = dma.hbm_to_vmem [thread:$0]  %s5, 8192, %s60, [#allocation9], 256, 256, 16
    $region25: #{simple_nn_forward.1} parent=1 // pred_fallthru
      _
    // Predicated region
    $region26: #{simple_nn_forward.1} parent=1 // pred_check
      _
    $region27: #{simple_nn_forward.1} parent=1 // pred_check_branch
      %67 = sbr.rel (0) target = $region29
    $region28: #{simple_nn_forward.1} parent=1 // pred_region
      _
    $region29: #{simple_nn_forward.1} parent=1 // pred_fallthru
      _
    // Predicated region
    $region30: #{simple_nn_forward.1} parent=1 // pred_check
      _
    $region31: #{simple_nn_forward.1} parent=1 // pred_check_branch
      %69 = sbr.rel (0) target = $region33
    $region32: #{simple_nn_forward.1} parent=1 // pred_region
      %70 = dma.done [#allocation3], 128
    $region33: #{simple_nn_forward.1} parent=1 // pred_fallthru
      _
    // Predicated region
    $region34: #{simple_nn_forward.1} parent=1 // pred_check
      _
    $region35: #{simple_nn_forward.1} parent=1 // pred_check_branch
      %72 = sbr.rel (0) target = $region37
    $region36: #{simple_nn_forward.1} parent=1 // pred_region
      %73 = dma.done [#allocation6], 512
    $region37: #{simple_nn_forward.1} parent=1 // pred_fallthru
      _
    // Predicated region
    $region38: #{simple_nn_forward.1} parent=1 // pred_check
      _
    $region39: #{simple_nn_forward.1} parent=1 // pred_check_branch
      %75 = sbr.rel (0) target = $region41
    $region40: #{simple_nn_forward.1} parent=1 // pred_region
      %76 = dma.done [#allocation6], 2048
    $region41: #{simple_nn_forward.1} parent=1 // pred_fallthru
      _
    // Predicated region
    $region42: #{simple_nn_forward.1} parent=1 // pred_check
      _
    $region43: #{simple_nn_forward.1} parent=1 // pred_check_branch
      %78 = sbr.rel (0) target = $region45
    $region44: #{simple_nn_forward.1} parent=1 // pred_region
      %79 = dma.done [#allocation9], 8192
    $region45: #{simple_nn_forward.1} parent=1 // pred_fallthru
      _
    %v81 = vld [vmem:[#allocation2] sm:$0xff]
    %v82 = vpack.c.bf16 %v81, %v81
    %v83 = vld [vmem:[#allocation5] sm:$0xf]
    %v84 = vld [vmem:[#allocation5 + $0x4] sm:$0xf]
    %v85 = vld [vmem:[#allocation5 + $0x8] sm:$0xf]
    %v86 = vld [vmem:[#allocation5 + $0xc] sm:$0xf]
    %v87 = vld [vmem:[#allocation5 + $0x10] sm:$0xf]
    %v88 = vld [vmem:[#allocation5 + $0x14] sm:$0xf]
    %v89 = vld [vmem:[#allocation5 + $0x18] sm:$0xf]
    %v90 = vld [vmem:[#allocation5 + $0x1c] sm:$0xf]
    %v91 = vld [vmem:[%s2] sm:$0x1]
    %v93 = vlaneseq
    %v94 = vshrl.u32 %v93, 7
    %v95 = vsub.s32 0, %v94
    %v96 = vrot.slane %v91, %v95
    %v106 = vunpack.c.l.b16 %v83
    %v107 = vunpack.c.l.b16 %v84
    %v108 = vunpack.c.l.b16 %v85
    %v109 = vunpack.c.l.b16 %v86
    %v110 = vunpack.c.l.b16 %v87
    %v111 = vunpack.c.l.b16 %v88
    %v112 = vunpack.c.l.b16 %v89
    %v113 = vunpack.c.l.b16 %v90
    %v114 = vpack.c.b16 %v107, %v106
    %v115 = vpack.c.b16 %v109, %v108
    %v116 = vpack.c.b16 %v111, %v110
    %v117 = vpack.c.b16 %v113, %v112
    %vm122 = vcmask 523264
    %v124 = vsel %vm122, %v82, 0
    %126 = vmatprep.subr.bf16.mxu0 0
    %127 = vmatpush1.bf16.msra.mxu0 %v114
    %128 = vmatprep.subr.bf16.mxu0 0
    %129 = vmatpush1.bf16.msra.mxu0 %v115
    %130 = vmatprep.subr.bf16.mxu0 0
    %131 = vmatpush1.bf16.msra.mxu0 %v116
    %132 = vmatprep.subr.bf16.mxu0 0
    %133 = vmatpush1.bf16.msra.mxu0 %v117
    %134 = vmatprep.subr.bf16.mxu0 0
    %135 = vmatpush1.bf16.msra.mxu0 0
    %136 = vmatprep.subr.bf16.mxu0 0
    %137 = vmatpush1.bf16.msra.mxu0 0
    %138 = vmatprep.subr.bf16.mxu0 0
    %139 = vmatpush1.bf16.msra.mxu0 0
    %140 = vmatprep.subr.bf16.mxu0 0
    %141 = vmatpush1.bf16.msra.mxu0 0
    %142 = vmatprep.subr.bf16.mxu0 0
    %143 = vmatpush1.bf16.msra.mxu0 0
    %144 = vmatprep.subr.bf16.mxu0 0
    %145 = vmatpush1.bf16.msra.mxu0 0
    %146 = vmatprep.subr.bf16.mxu0 0
    %147 = vmatpush1.bf16.msra.mxu0 0
    %148 = vmatprep.subr.bf16.mxu0 0
    %149 = vmatpush1.bf16.msra.mxu0 0
    %150 = vmatprep.subr.bf16.mxu0 0
    %151 = vmatpush1.bf16.msra.mxu0 0
    %152 = vmatprep.subr.bf16.mxu0 0
    %153 = vmatpush1.bf16.msra.mxu0 0
    %154 = vmatprep.subr.bf16.mxu0 0
    %155 = vmatpush1.bf16.msra.mxu0 0
    %156 = vmatprep.subr.bf16.mxu0 0
    %157 = vmatpush1.bf16.msra.mxu0 0
    %158 = vmatprep.mubr.bf16.mxu0 0
    %159 = vmatmul.mubr.bf16.gmra.mrb[0].mxu0 %v124
    %v160 = vpop.f32.mrb[0].mxu0
    %v161 = vadd.f32 %v96, %v160
    %v162 = vpop.f32.mrb[0].mxu0
    %v163 = vpop.f32.mrb[0].mxu0
    %v164 = vpop.f32.mrb[0].mxu0
    %165 = vdwg.mxu0
    %v166 = vmax.f32 %v161, 0.0
    %v167 = vpack.c.bf16 %v166, %v166
    %v168 = vld [vmem:[#allocation7] sm:$0xff]
    %v169 = vld [vmem:[#allocation7 + $0x8] sm:$0xff]
    %v170 = vld [vmem:[#allocation7 + $0x10] sm:$0xff]
    %v171 = vld [vmem:[#allocation7 + $0x18] sm:$0xff]
    %v172 = vld [vmem:[#allocation7 + $0x20] sm:$0xff]
    %v173 = vld [vmem:[#allocation7 + $0x28] sm:$0xff]
    %v174 = vld [vmem:[#allocation7 + $0x30] sm:$0xff]
    %v175 = vld [vmem:[#allocation7 + $0x38] sm:$0xff]
    %v176 = vld [vmem:[#allocation7 + $0x40] sm:$0xff]
    %v177 = vld [vmem:[#allocation7 + $0x48] sm:$0xff]
    %v178 = vld [vmem:[#allocation7 + $0x50] sm:$0xff]
    %v179 = vld [vmem:[#allocation7 + $0x58] sm:$0xff]
    %v180 = vld [vmem:[#allocation7 + $0x60] sm:$0xff]
    %v181 = vld [vmem:[#allocation7 + $0x68] sm:$0xff]
    %v182 = vld [vmem:[#allocation7 + $0x70] sm:$0xff]
    %v183 = vld [vmem:[#allocation7 + $0x78] sm:$0xff]
    %v184 = vld [vmem:[%s4] sm:$0x3]
    %v186 = vlaneseq
    %v187 = vshrl.u32 %v186, 7
    %v188 = vsub.s32 0, %v187
    %v189 = vrot.slane %v184, %v188
    %v190 = vlaneseq
    %v191 = vshrl.u32 %v190, 7
    %v192 = vsub.s32 1, %v191
    %v193 = vrot.slane %v184, %v192
    %v212 = vunpack.c.l.b16 %v168
    %v213 = vunpack.c.h.b16 %v168
    %v214 = vunpack.c.l.b16 %v169
    %v215 = vunpack.c.h.b16 %v169
    %v216 = vunpack.c.l.b16 %v170
    %v217 = vunpack.c.h.b16 %v170
    %v218 = vunpack.c.l.b16 %v171
    %v219 = vunpack.c.h.b16 %v171
    %v220 = vunpack.c.l.b16 %v172
    %v221 = vunpack.c.h.b16 %v172
    %v222 = vunpack.c.l.b16 %v173
    %v223 = vunpack.c.h.b16 %v173
    %v224 = vunpack.c.l.b16 %v174
    %v225 = vunpack.c.h.b16 %v174
    %v226 = vunpack.c.l.b16 %v175
    %v227 = vunpack.c.h.b16 %v175
    %v228 = vunpack.c.l.b16 %v176
    %v229 = vunpack.c.h.b16 %v176
    %v230 = vunpack.c.l.b16 %v177
    %v231 = vunpack.c.h.b16 %v177
    %v232 = vunpack.c.l.b16 %v178
    %v233 = vunpack.c.h.b16 %v178
    %v234 = vunpack.c.l.b16 %v179
    %v235 = vunpack.c.h.b16 %v179
    %v236 = vunpack.c.l.b16 %v180
    %v237 = vunpack.c.h.b16 %v180
    %v238 = vunpack.c.l.b16 %v181
    %v239 = vunpack.c.h.b16 %v181
    %v240 = vunpack.c.l.b16 %v182
    %v241 = vunpack.c.h.b16 %v182
    %v242 = vunpack.c.l.b16 %v183
    %v243 = vunpack.c.h.b16 %v183
    %v244 = vpack.c.b16 %v214, %v212
    %v245 = vpack.c.b16 %v215, %v213
    %v246 = vpack.c.b16 %v218, %v216
    %v247 = vpack.c.b16 %v219, %v217
    %v248 = vpack.c.b16 %v222, %v220
    %v249 = vpack.c.b16 %v223, %v221
    %v250 = vpack.c.b16 %v226, %v224
    %v251 = vpack.c.b16 %v227, %v225
    %v252 = vpack.c.b16 %v230, %v228
    %v253 = vpack.c.b16 %v231, %v229
    %v254 = vpack.c.b16 %v234, %v232
    %v255 = vpack.c.b16 %v235, %v233
    %v256 = vpack.c.b16 %v238, %v236
    %v257 = vpack.c.b16 %v239, %v237
    %v258 = vpack.c.b16 %v242, %v240
    %v259 = vpack.c.b16 %v243, %v241
    %276 = vmatprep.subr.bf16.mxu0 %v245
    %277 = vmatpush1.bf16.msra.mxu0 %v244
    %278 = vmatprep.subr.bf16.mxu0 %v247
    %279 = vmatpush1.bf16.msra.mxu0 %v246
    %280 = vmatprep.subr.bf16.mxu0 %v249
    %281 = vmatpush1.bf16.msra.mxu0 %v248
    %282 = vmatprep.subr.bf16.mxu0 %v251
    %283 = vmatpush1.bf16.msra.mxu0 %v250
    %284 = vmatprep.subr.bf16.mxu0 %v253
    %285 = vmatpush1.bf16.msra.mxu0 %v252
    %286 = vmatprep.subr.bf16.mxu0 %v255
    %287 = vmatpush1.bf16.msra.mxu0 %v254
    %288 = vmatprep.subr.bf16.mxu0 %v257
    %289 = vmatpush1.bf16.msra.mxu0 %v256
    %290 = vmatprep.subr.bf16.mxu0 %v259
    %291 = vmatpush1.bf16.msra.mxu0 %v258
    %292 = vmatprep.subr.bf16.mxu0 0
    %293 = vmatpush1.bf16.msra.mxu0 0
    %294 = vmatprep.subr.bf16.mxu0 0
    %295 = vmatpush1.bf16.msra.mxu0 0
    %296 = vmatprep.subr.bf16.mxu0 0
    %297 = vmatpush1.bf16.msra.mxu0 0
    %298 = vmatprep.subr.bf16.mxu0 0
    %299 = vmatpush1.bf16.msra.mxu0 0
    %300 = vmatprep.subr.bf16.mxu0 0
    %301 = vmatpush1.bf16.msra.mxu0 0
    %302 = vmatprep.subr.bf16.mxu0 0
    %303 = vmatpush1.bf16.msra.mxu0 0
    %304 = vmatprep.subr.bf16.mxu0 0
    %305 = vmatpush1.bf16.msra.mxu0 0
    %306 = vmatprep.subr.bf16.mxu0 0
    %307 = vmatpush1.bf16.msra.mxu0 0
    %308 = vmatprep.mubr.bf16.mxu0 0
    %309 = vmatmul.mubr.bf16.gmra.mrb[0].mxu0 %v167
    %v310 = vpop.f32.mrb[0].mxu0
    %v311 = vadd.f32 %v189, %v310
    %v312 = vpop.f32.mrb[0].mxu0
    %v313 = vadd.f32 %v193, %v312
    %v314 = vpop.f32.mrb[0].mxu0
    %v315 = vpop.f32.mrb[0].mxu0
    %316 = vdwg.mxu0
    %v317 = vmax.f32 %v311, 0.0
    %v318 = vmax.f32 %v313, 0.0
    %v319 = vpack.c.bf16 %v317, %v317
    %v320 = vpack.c.bf16 %v318, %v318
    %v321 = vld [vmem:[#allocation8] sm:$0xff]
    %v322 = vld [vmem:[#allocation8 + $0x8] sm:$0xff]
    %v323 = vld [vmem:[#allocation8 + $0x10] sm:$0xff]
    %v324 = vld [vmem:[#allocation8 + $0x18] sm:$0xff]
    %v325 = vld [vmem:[#allocation8 + $0x20] sm:$0xff]
    %v326 = vld [vmem:[#allocation8 + $0x28] sm:$0xff]
    %v327 = vld [vmem:[#allocation8 + $0x30] sm:$0xff]
    %v328 = vld [vmem:[#allocation8 + $0x38] sm:$0xff]
    %v329 = vld [vmem:[#allocation8 + $0x40] sm:$0xff]
    %v330 = vld [vmem:[#allocation8 + $0x48] sm:$0xff]
    %v331 = vld [vmem:[#allocation8 + $0x50] sm:$0xff]
    %v332 = vld [vmem:[#allocation8 + $0x58] sm:$0xff]
    %v333 = vld [vmem:[#allocation8 + $0x60] sm:$0xff]
    %v334 = vld [vmem:[#allocation8 + $0x68] sm:$0xff]
    %v335 = vld [vmem:[#allocation8 + $0x70] sm:$0xff]
    %v336 = vld [vmem:[#allocation8 + $0x78] sm:$0xff]
    %v337 = vld [vmem:[#allocation8 + $0x80] sm:$0xff]
    %v338 = vld [vmem:[#allocation8 + $0x88] sm:$0xff]
    %v339 = vld [vmem:[#allocation8 + $0x90] sm:$0xff]
    %v340 = vld [vmem:[#allocation8 + $0x98] sm:$0xff]
    %v341 = vld [vmem:[#allocation8 + $0xa0] sm:$0xff]
    %v342 = vld [vmem:[#allocation8 + $0xa8] sm:$0xff]
    %v343 = vld [vmem:[#allocation8 + $0xb0] sm:$0xff]
    %v344 = vld [vmem:[#allocation8 + $0xb8] sm:$0xff]
    %v345 = vld [vmem:[#allocation8 + $0xc0] sm:$0xff]
    %v346 = vld [vmem:[#allocation8 + $0xc8] sm:$0xff]
    %v347 = vld [vmem:[#allocation8 + $0xd0] sm:$0xff]
    %v348 = vld [vmem:[#allocation8 + $0xd8] sm:$0xff]
    %v349 = vld [vmem:[#allocation8 + $0xe0] sm:$0xff]
    %v350 = vld [vmem:[#allocation8 + $0xe8] sm:$0xff]
    %v351 = vld [vmem:[#allocation8 + $0xf0] sm:$0xff]
    %v352 = vld [vmem:[#allocation8 + $0xf8] sm:$0xff]
    %v353 = vld [vmem:[#allocation8 + $0x100] sm:$0xff]
    %v354 = vld [vmem:[#allocation8 + $0x108] sm:$0xff]
    %v355 = vld [vmem:[#allocation8 + $0x110] sm:$0xff]
    %v356 = vld [vmem:[#allocation8 + $0x118] sm:$0xff]
    %v357 = vld [vmem:[#allocation8 + $0x120] sm:$0xff]
    %v358 = vld [vmem:[#allocation8 + $0x128] sm:$0xff]
    %v359 = vld [vmem:[#allocation8 + $0x130] sm:$0xff]
    %v360 = vld [vmem:[#allocation8 + $0x138] sm:$0xff]
    %v361 = vld [vmem:[#allocation8 + $0x140] sm:$0xff]
    %v362 = vld [vmem:[#allocation8 + $0x148] sm:$0xff]
    %v363 = vld [vmem:[#allocation8 + $0x150] sm:$0xff]
    %v364 = vld [vmem:[#allocation8 + $0x158] sm:$0xff]
    %v365 = vld [vmem:[#allocation8 + $0x160] sm:$0xff]
    %v366 = vld [vmem:[#allocation8 + $0x168] sm:$0xff]
    %v367 = vld [vmem:[#allocation8 + $0x170] sm:$0xff]
    %v368 = vld [vmem:[#allocation8 + $0x178] sm:$0xff]
    %v369 = vld [vmem:[#allocation8 + $0x180] sm:$0xff]
    %v370 = vld [vmem:[#allocation8 + $0x188] sm:$0xff]
    %v371 = vld [vmem:[#allocation8 + $0x190] sm:$0xff]
    %v372 = vld [vmem:[#allocation8 + $0x198] sm:$0xff]
    %v373 = vld [vmem:[#allocation8 + $0x1a0] sm:$0xff]
    %v374 = vld [vmem:[#allocation8 + $0x1a8] sm:$0xff]
    %v375 = vld [vmem:[#allocation8 + $0x1b0] sm:$0xff]
    %v376 = vld [vmem:[#allocation8 + $0x1b8] sm:$0xff]
    %v377 = vld [vmem:[#allocation8 + $0x1c0] sm:$0xff]
    %v378 = vld [vmem:[#allocation8 + $0x1c8] sm:$0xff]
    %v379 = vld [vmem:[#allocation8 + $0x1d0] sm:$0xff]
    %v380 = vld [vmem:[#allocation8 + $0x1d8] sm:$0xff]
    %v381 = vld [vmem:[#allocation8 + $0x1e0] sm:$0xff]
    %v382 = vld [vmem:[#allocation8 + $0x1e8] sm:$0xff]
    %v383 = vld [vmem:[#allocation8 + $0x1f0] sm:$0xff]
    %v384 = vld [vmem:[#allocation8 + $0x1f8] sm:$0xff]
    %v385 = vld [vmem:[%s6] sm:$0xf]
    %v387 = vlaneseq
    %v388 = vshrl.u32 %v387, 7
    %v389 = vsub.s32 0, %v388
    %v390 = vrot.slane %v385, %v389
    %v391 = vlaneseq
    %v392 = vshrl.u32 %v391, 7
    %v393 = vsub.s32 1, %v392
    %v394 = vrot.slane %v385, %v393
    %v395 = vlaneseq
    %v396 = vshrl.u32 %v395, 7
    %v397 = vsub.s32 2, %v396
    %v398 = vrot.slane %v385, %v397
    %v399 = vlaneseq
    %v400 = vshrl.u32 %v399, 7
    %v401 = vsub.s32 3, %v400
    %v402 = vrot.slane %v385, %v401
    %v471 = vunpack.c.l.b16 %v321
    %v472 = vunpack.c.h.b16 %v321
    %v473 = vunpack.c.l.b16 %v322
    %v474 = vunpack.c.h.b16 %v322
    %v475 = vunpack.c.l.b16 %v323
    %v476 = vunpack.c.h.b16 %v323
    %v477 = vunpack.c.l.b16 %v324
    %v478 = vunpack.c.h.b16 %v324
    %v479 = vunpack.c.l.b16 %v325
    %v480 = vunpack.c.h.b16 %v325
    %v481 = vunpack.c.l.b16 %v326
    %v482 = vunpack.c.h.b16 %v326
    %v483 = vunpack.c.l.b16 %v327
    %v484 = vunpack.c.h.b16 %v327
    %v485 = vunpack.c.l.b16 %v328
    %v486 = vunpack.c.h.b16 %v328
    %v487 = vunpack.c.l.b16 %v329
    %v488 = vunpack.c.h.b16 %v329
    %v489 = vunpack.c.l.b16 %v330
    %v490 = vunpack.c.h.b16 %v330
    %v491 = vunpack.c.l.b16 %v331
    %v492 = vunpack.c.h.b16 %v331
    %v493 = vunpack.c.l.b16 %v332
    %v494 = vunpack.c.h.b16 %v332
    %v495 = vunpack.c.l.b16 %v333
    %v496 = vunpack.c.h.b16 %v333
    %v497 = vunpack.c.l.b16 %v334
    %v498 = vunpack.c.h.b16 %v334
    %v499 = vunpack.c.l.b16 %v335
    %v500 = vunpack.c.h.b16 %v335
    %v501 = vunpack.c.l.b16 %v336
    %v502 = vunpack.c.h.b16 %v336
    %v503 = vunpack.c.l.b16 %v337
    %v504 = vunpack.c.h.b16 %v337
    %v505 = vunpack.c.l.b16 %v338
    %v506 = vunpack.c.h.b16 %v338
    %v507 = vunpack.c.l.b16 %v339
    %v508 = vunpack.c.h.b16 %v339
    %v509 = vunpack.c.l.b16 %v340
    %v510 = vunpack.c.h.b16 %v340
    %v511 = vunpack.c.l.b16 %v341
    %v512 = vunpack.c.h.b16 %v341
    %v513 = vunpack.c.l.b16 %v342
    %v514 = vunpack.c.h.b16 %v342
    %v515 = vunpack.c.l.b16 %v343
    %v516 = vunpack.c.h.b16 %v343
    %v517 = vunpack.c.l.b16 %v344
    %v518 = vunpack.c.h.b16 %v344
    %v519 = vunpack.c.l.b16 %v345
    %v520 = vunpack.c.h.b16 %v345
    %v521 = vunpack.c.l.b16 %v346
    %v522 = vunpack.c.h.b16 %v346
    %v523 = vunpack.c.l.b16 %v347
    %v524 = vunpack.c.h.b16 %v347
    %v525 = vunpack.c.l.b16 %v348
    %v526 = vunpack.c.h.b16 %v348
    %v527 = vunpack.c.l.b16 %v349
    %v528 = vunpack.c.h.b16 %v349
    %v529 = vunpack.c.l.b16 %v350
    %v530 = vunpack.c.h.b16 %v350
    %v531 = vunpack.c.l.b16 %v351
    %v532 = vunpack.c.h.b16 %v351
    %v533 = vunpack.c.l.b16 %v352
    %v534 = vunpack.c.h.b16 %v352
    %v535 = vunpack.c.l.b16 %v353
    %v536 = vunpack.c.h.b16 %v353
    %v537 = vunpack.c.l.b16 %v354
    %v538 = vunpack.c.h.b16 %v354
    %v539 = vunpack.c.l.b16 %v355
    %v540 = vunpack.c.h.b16 %v355
    %v541 = vunpack.c.l.b16 %v356
    %v542 = vunpack.c.h.b16 %v356
    %v543 = vunpack.c.l.b16 %v357
    %v544 = vunpack.c.h.b16 %v357
    %v545 = vunpack.c.l.b16 %v358
    %v546 = vunpack.c.h.b16 %v358
    %v547 = vunpack.c.l.b16 %v359
    %v548 = vunpack.c.h.b16 %v359
    %v549 = vunpack.c.l.b16 %v360
    %v550 = vunpack.c.h.b16 %v360
    %v551 = vunpack.c.l.b16 %v361
    %v552 = vunpack.c.h.b16 %v361
    %v553 = vunpack.c.l.b16 %v362
    %v554 = vunpack.c.h.b16 %v362
    %v555 = vunpack.c.l.b16 %v363
    %v556 = vunpack.c.h.b16 %v363
    %v557 = vunpack.c.l.b16 %v364
    %v558 = vunpack.c.h.b16 %v364
    %v559 = vunpack.c.l.b16 %v365
    %v560 = vunpack.c.h.b16 %v365
    %v561 = vunpack.c.l.b16 %v366
    %v562 = vunpack.c.h.b16 %v366
    %v563 = vunpack.c.l.b16 %v367
    %v564 = vunpack.c.h.b16 %v367
    %v565 = vunpack.c.l.b16 %v368
    %v566 = vunpack.c.h.b16 %v368
    %v567 = vunpack.c.l.b16 %v369
    %v568 = vunpack.c.h.b16 %v369
    %v569 = vunpack.c.l.b16 %v370
    %v570 = vunpack.c.h.b16 %v370
    %v571 = vunpack.c.l.b16 %v371
    %v572 = vunpack.c.h.b16 %v371
    %v573 = vunpack.c.l.b16 %v372
    %v574 = vunpack.c.h.b16 %v372
    %v575 = vunpack.c.l.b16 %v373
    %v576 = vunpack.c.h.b16 %v373
    %v577 = vunpack.c.l.b16 %v374
    %v578 = vunpack.c.h.b16 %v374
    %v579 = vunpack.c.l.b16 %v375
    %v580 = vunpack.c.h.b16 %v375
    %v581 = vunpack.c.l.b16 %v376
    %v582 = vunpack.c.h.b16 %v376
    %v583 = vunpack.c.l.b16 %v377
    %v584 = vunpack.c.h.b16 %v377
    %v585 = vunpack.c.l.b16 %v378
    %v586 = vunpack.c.h.b16 %v378
    %v587 = vunpack.c.l.b16 %v379
    %v588 = vunpack.c.h.b16 %v379
    %v589 = vunpack.c.l.b16 %v380
    %v590 = vunpack.c.h.b16 %v380
    %v591 = vunpack.c.l.b16 %v381
    %v592 = vunpack.c.h.b16 %v381
    %v593 = vunpack.c.l.b16 %v382
    %v594 = vunpack.c.h.b16 %v382
    %v595 = vunpack.c.l.b16 %v383
    %v596 = vunpack.c.h.b16 %v383
    %v597 = vunpack.c.l.b16 %v384
    %v598 = vunpack.c.h.b16 %v384
    %v599 = vpack.c.b16 %v475, %v471
    %v600 = vpack.c.b16 %v476, %v472
    %v601 = vpack.c.b16 %v477, %v473
    %v602 = vpack.c.b16 %v478, %v474
    %v603 = vpack.c.b16 %v483, %v479
    %v604 = vpack.c.b16 %v484, %v480
    %v605 = vpack.c.b16 %v485, %v481
    %v606 = vpack.c.b16 %v486, %v482
    %v607 = vpack.c.b16 %v491, %v487
    %v608 = vpack.c.b16 %v492, %v488
    %v609 = vpack.c.b16 %v493, %v489
    %v610 = vpack.c.b16 %v494, %v490
    %v611 = vpack.c.b16 %v499, %v495
    %v612 = vpack.c.b16 %v500, %v496
    %v613 = vpack.c.b16 %v501, %v497
    %v614 = vpack.c.b16 %v502, %v498
    %v615 = vpack.c.b16 %v507, %v503
    %v616 = vpack.c.b16 %v508, %v504
    %v617 = vpack.c.b16 %v509, %v505
    %v618 = vpack.c.b16 %v510, %v506
    %v619 = vpack.c.b16 %v515, %v511
    %v620 = vpack.c.b16 %v516, %v512
    %v621 = vpack.c.b16 %v517, %v513
    %v622 = vpack.c.b16 %v518, %v514
    %v623 = vpack.c.b16 %v523, %v519
    %v624 = vpack.c.b16 %v524, %v520
    %v625 = vpack.c.b16 %v525, %v521
    %v626 = vpack.c.b16 %v526, %v522
    %v627 = vpack.c.b16 %v531, %v527
    %v628 = vpack.c.b16 %v532, %v528
    %v629 = vpack.c.b16 %v533, %v529
    %v630 = vpack.c.b16 %v534, %v530
    %v631 = vpack.c.b16 %v539, %v535
    %v632 = vpack.c.b16 %v540, %v536
    %v633 = vpack.c.b16 %v541, %v537
    %v634 = vpack.c.b16 %v542, %v538
    %v635 = vpack.c.b16 %v547, %v543
    %v636 = vpack.c.b16 %v548, %v544
    %v637 = vpack.c.b16 %v549, %v545
    %v638 = vpack.c.b16 %v550, %v546
    %v639 = vpack.c.b16 %v555, %v551
    %v640 = vpack.c.b16 %v556, %v552
    %v641 = vpack.c.b16 %v557, %v553
    %v642 = vpack.c.b16 %v558, %v554
    %v643 = vpack.c.b16 %v563, %v559
    %v644 = vpack.c.b16 %v564, %v560
    %v645 = vpack.c.b16 %v565, %v561
    %v646 = vpack.c.b16 %v566, %v562
    %v647 = vpack.c.b16 %v571, %v567
    %v648 = vpack.c.b16 %v572, %v568
    %v649 = vpack.c.b16 %v573, %v569
    %v650 = vpack.c.b16 %v574, %v570
    %v651 = vpack.c.b16 %v579, %v575
    %v652 = vpack.c.b16 %v580, %v576
    %v653 = vpack.c.b16 %v581, %v577
    %v654 = vpack.c.b16 %v582, %v578
    %v655 = vpack.c.b16 %v587, %v583
    %v656 = vpack.c.b16 %v588, %v584
    %v657 = vpack.c.b16 %v589, %v585
    %v658 = vpack.c.b16 %v590, %v586
    %v659 = vpack.c.b16 %v595, %v591
    %v660 = vpack.c.b16 %v596, %v592
    %v661 = vpack.c.b16 %v597, %v593
    %v662 = vpack.c.b16 %v598, %v594
    %727 = vmatprep.subr.bf16.mxu0 %v600
    %728 = vmatpush1.bf16.msra.mxu0 %v599
    %729 = vmatprep.subr.bf16.mxu0 %v604
    %730 = vmatpush1.bf16.msra.mxu0 %v603
    %731 = vmatprep.subr.bf16.mxu0 %v608
    %732 = vmatpush1.bf16.msra.mxu0 %v607
    %733 = vmatprep.subr.bf16.mxu0 %v612
    %734 = vmatpush1.bf16.msra.mxu0 %v611
    %735 = vmatprep.subr.bf16.mxu0 %v616
    %736 = vmatpush1.bf16.msra.mxu0 %v615
    %737 = vmatprep.subr.bf16.mxu0 %v620
    %738 = vmatpush1.bf16.msra.mxu0 %v619
    %739 = vmatprep.subr.bf16.mxu0 %v624
    %740 = vmatpush1.bf16.msra.mxu0 %v623
    %741 = vmatprep.subr.bf16.mxu0 %v628
    %742 = vmatpush1.bf16.msra.mxu0 %v627
    %743 = vmatprep.subr.bf16.mxu0 %v632
    %744 = vmatpush1.bf16.msra.mxu0 %v631
    %745 = vmatprep.subr.bf16.mxu0 %v636
    %746 = vmatpush1.bf16.msra.mxu0 %v635
    %747 = vmatprep.subr.bf16.mxu0 %v640
    %748 = vmatpush1.bf16.msra.mxu0 %v639
    %749 = vmatprep.subr.bf16.mxu0 %v644
    %750 = vmatpush1.bf16.msra.mxu0 %v643
    %751 = vmatprep.subr.bf16.mxu0 %v648
    %752 = vmatpush1.bf16.msra.mxu0 %v647
    %753 = vmatprep.subr.bf16.mxu0 %v652
    %754 = vmatpush1.bf16.msra.mxu0 %v651
    %755 = vmatprep.subr.bf16.mxu0 %v656
    %756 = vmatpush1.bf16.msra.mxu0 %v655
    %757 = vmatprep.subr.bf16.mxu0 %v660
    %758 = vmatpush1.bf16.msra.mxu0 %v659
    %759 = vmatprep.mubr.bf16.mxu0 %v320
    %760 = vmatmul.mubr.bf16.gmra.mrb[0].mxu0 %v319
    %v761 = vpop.f32.mrb[0].mxu0
    %v762 = vadd.f32 %v390, %v761
    %v763 = vpop.f32.mrb[0].mxu0
    %v764 = vadd.f32 %v394, %v763
    %v765 = vpop.f32.mrb[0].mxu0
    %v766 = vpop.f32.mrb[0].mxu0
    %767 = vdwg.mxu0
    %768 = vmatprep.subr.bf16.mxu0 %v602
    %769 = vmatpush1.bf16.msra.mxu0 %v601
    %770 = vmatprep.subr.bf16.mxu0 %v606
    %771 = vmatpush1.bf16.msra.mxu0 %v605
    %772 = vmatprep.subr.bf16.mxu0 %v610
    %773 = vmatpush1.bf16.msra.mxu0 %v609
    %774 = vmatprep.subr.bf16.mxu0 %v614
    %775 = vmatpush1.bf16.msra.mxu0 %v613
    %776 = vmatprep.subr.bf16.mxu0 %v618
    %777 = vmatpush1.bf16.msra.mxu0 %v617
    %778 = vmatprep.subr.bf16.mxu0 %v622
    %779 = vmatpush1.bf16.msra.mxu0 %v621
    %780 = vmatprep.subr.bf16.mxu0 %v626
    %781 = vmatpush1.bf16.msra.mxu0 %v625
    %782 = vmatprep.subr.bf16.mxu0 %v630
    %783 = vmatpush1.bf16.msra.mxu0 %v629
    %784 = vmatprep.subr.bf16.mxu0 %v634
    %785 = vmatpush1.bf16.msra.mxu0 %v633
    %786 = vmatprep.subr.bf16.mxu0 %v638
    %787 = vmatpush1.bf16.msra.mxu0 %v637
    %788 = vmatprep.subr.bf16.mxu0 %v642
    %789 = vmatpush1.bf16.msra.mxu0 %v641
    %790 = vmatprep.subr.bf16.mxu0 %v646
    %791 = vmatpush1.bf16.msra.mxu0 %v645
    %792 = vmatprep.subr.bf16.mxu0 %v650
    %793 = vmatpush1.bf16.msra.mxu0 %v649
    %794 = vmatprep.subr.bf16.mxu0 %v654
    %795 = vmatpush1.bf16.msra.mxu0 %v653
    %796 = vmatprep.subr.bf16.mxu0 %v658
    %797 = vmatpush1.bf16.msra.mxu0 %v657
    %798 = vmatprep.subr.bf16.mxu0 %v662
    %799 = vmatpush1.bf16.msra.mxu0 %v661
    %800 = vmatprep.mubr.bf16.mxu0 %v320
    %801 = vmatmul.mubr.bf16.gmra.mrb[0].mxu0 %v319
    %v802 = vpop.f32.mrb[0].mxu0
    %v803 = vadd.f32 %v398, %v802
    %v804 = vpop.f32.mrb[0].mxu0
    %v805 = vadd.f32 %v402, %v804
    %v806 = vpop.f32.mrb[0].mxu0
    %v807 = vpop.f32.mrb[0].mxu0
    %808 = vdwg.mxu0
    %v809 = vpack.c.bf16 %v762, %v762
    %v810 = vpack.c.bf16 %v764, %v764
    %v811 = vpack.c.bf16 %v803, %v803
    %v812 = vpack.c.bf16 %v805, %v805
    %v817 = vunpack.c.l.b16 %v809
    %v818 = vunpack.c.l.b16 %v810
    %v819 = vunpack.c.l.b16 %v811
    %v820 = vunpack.c.l.b16 %v812
    %v821 = vpack.c.b16 %v818, %v817
    %v822 = vpack.c.b16 %v820, %v819
    %825 = vst [vmem:[#allocation10] sm:$0xff] %v821
    %826 = vst [vmem:[#allocation10 + $0x8] sm:$0xff] %v822
    // Predicated region
    $region46: #{simple_nn_forward.1} parent=1 // pred_check
      _
    $region47: #{simple_nn_forward.1} parent=1 // pred_check_branch
      %828 = sbr.rel (0) target = $region49
    $region48: #{simple_nn_forward.1} parent=1 // pred_region
      %s830 = ssub.s32 256, 256
      %831 = vsyncadd [#allocation4], %s830
      %s833 = sshll.u32 [#allocation10], 4
      %s834 = int_to_ptr.vmem [resolvable:$true] %s833
      %836 = dma.vmem_to_hbm [thread:$0]  %s834, 256, %s7, [#allocation4]
    $region49: #{simple_nn_forward.1} parent=1 // pred_fallthru
      _
    // Predicated region
    $region50: #{simple_nn_forward.1} parent=1 // pred_check
      _
    $region51: #{simple_nn_forward.1} parent=1 // pred_check_branch
      %838 = sbr.rel (0) target = $region53
    $region52: #{simple_nn_forward.1} parent=1 // pred_region
      %839 = dma.done [#allocation4], 256
    $region53: #{simple_nn_forward.1} parent=1 // pred_fallthru
      _
    %840 = vsyncpa [#allocation3], 1
    %841 = vsyncpa [#allocation6], 1
    %842 = vsyncpa [#allocation9], 1
    %843 = vsyncpa [#allocation4], 1

</llo_original>
